<compile_context>
chip_gen: v7x
topology: tpu7x:2x2x1
jax: 0.10.0
libtpu: 0.0.40
codegen_flags: <defaults>
</compile_context>

<pallas_src>
import functools

import jax
import jax.numpy as jnp
from jax.experimental import pallas as pl
from jax.experimental.pallas import tpu as pltpu

# ---------------- small config (consistent with the module) ----------------
B = 2                       # batch
SEQ = 8                     # text sequence length
HIDDEN = 128                # hidden size (lane-dense: exactly one vreg wide)
VOCAB = 64                  # vocab_size
TYPE_VOCAB = 2              # type_vocab_size
MAX_POS = 16                # max_position_embeddings
MODALITY_VOCAB = 2          # modality_type_vocab_size
IMG = 16                    # image_size
PATCH = 4                   # patch_size
CHANNELS = 4                # num_channels
GRID = IMG // PATCH         # 4
NUM_PATCHES = GRID * GRID   # 16
PATCH_DIM = CHANNELS * PATCH * PATCH  # 64
S_TOTAL = SEQ + NUM_PATCHES + 1       # text + cls + patches = 25
IMAGE_TOKEN_TYPE_IDX = 1
LN_EPS = 1e-12

# Row layout of the stacked "small" parameter tensor (9, HIDDEN):
#   0: ln_w   1: ln_b   2: patch_b   3: cls_token   4: img_pos[cls]
#   5: mod_emb[0]   6: mod_emb[1]   7: type_emb[0]   8: type_emb[1]
_ROW_LN_W, _ROW_LN_B, _ROW_PATCH_B, _ROW_CLS, _ROW_IPOS_CLS = 0, 1, 2, 3, 4
_ROW_MOD0, _ROW_TYPE0 = 5, 7


# ---------------- fused kernel ----------------
def limoe_embeddings_kernel(ids_ref, tt_ref, patches_ref, word_ref,
                            tpos_ref, ipos_ref, pw_ref, small_ref,
                            emb_ref, *, seq, n_patches, img_type_idx, eps):
    f32 = jnp.float32
    T = ids_ref.shape[0]           # B * seq
    V = word_ref.shape[0]
    nb = emb_ref.shape[0]          # batch

    # ----- tiny row params (single stacked operand) -----
    ln_w = small_ref[_ROW_LN_W:_ROW_LN_W + 1, :]
    ln_b = small_ref[_ROW_LN_B:_ROW_LN_B + 1, :]
    patch_b = small_ref[_ROW_PATCH_B:_ROW_PATCH_B + 1, :]
    cls_tok = small_ref[_ROW_CLS:_ROW_CLS + 1, :]
    ipos_cls = small_ref[_ROW_IPOS_CLS:_ROW_IPOS_CLS + 1, :]
    mod_text = small_ref[_ROW_MOD0:_ROW_MOD0 + 1, :]
    mod_img = small_ref[_ROW_MOD0 + img_type_idx:_ROW_MOD0 + img_type_idx + 1, :]
    type0 = small_ref[_ROW_TYPE0:_ROW_TYPE0 + 1, :]
    type1 = small_ref[_ROW_TYPE0 + 1:_ROW_TYPE0 + 2, :]

    # ---------- text branch (BERT embeddings) ----------
    ids = ids_ref[...]             # (T, 1) int32
    tt = tt_ref[...]               # (T, 1) int32
    # Word lookup as one-hot x table MXU matmul (one-hot side is exact).
    word_oh = (jax.lax.broadcasted_iota(jnp.int32, (T, V), 1) == ids).astype(f32)
    emb = jnp.dot(word_oh, word_ref[...], preferred_element_type=f32)
    # type_vocab_size == 2: exact VPU row-select instead of a K=2 MXU matmul.
    emb = emb + jnp.where(tt == 0, type0, type1)          # (T, H)
    pos = tpos_ref[0:seq, :]                               # (seq, H) absolute positions

    # ---------- image branch (ViT patch embeddings) ----------
    # Conv2d(kernel=stride=patch) == im2col matmul; patches are pre-extracted.
    x = jnp.dot(patches_ref[...], pw_ref[...], preferred_element_type=f32) + patch_b
    cls_row = cls_tok + ipos_cls + mod_img                 # (1, H)
    ipos = ipos_ref[...]                                   # (P, H)

    # ---------- per-batch finalize + direct sub-slice stores ----------
    for b in range(nb):                                    # static unroll, nb == 2
        # text: + position, LayerNorm (single-pass variance), + modality 0
        e = emb[b * seq:(b + 1) * seq, :] + pos
        mean = jnp.mean(e, axis=-1, keepdims=True)
        msq = jnp.mean(e * e, axis=-1, keepdims=True)
        var = msq - mean * mean
        e = (e - mean) * jax.lax.rsqrt(var + eps) * ln_w + ln_b
        emb_ref[b, 0:seq, :] = e + mod_text
        # image: cls token row, then patch rows (+ positions + modality 1)
        emb_ref[b, seq:seq + 1, :] = cls_row
        emb_ref[b, seq + 1:, :] = (
            x[b * n_patches:(b + 1) * n_patches, :] + ipos + mod_img)


# ---------------- wrapper ----------------
def _vspec():
    return pl.BlockSpec(memory_space=pltpu.MemorySpace.VMEM)


def limoe_embeddings(input_ids, attention_mask, token_type_ids,
                     pixel_values, pixel_mask, prep):
    B_, S_ = input_ids.shape
    C, I = pixel_values.shape[1], pixel_values.shape[2]
    g = I // PATCH
    P = g * g
    H_ = prep["word_emb"].shape[1]
    T = B_ * S_
    s_total = S_ + P + 1

    # ----- per-call layout plumbing on inputs only (no parameter reshapes) -----
    ids2d = input_ids.reshape(T, 1).astype(jnp.int32)
    tt2d = token_type_ids.reshape(T, 1).astype(jnp.int32)
    # im2col patch extraction (Conv2d with kernel == stride == patch)
    patches = pixel_values.reshape(B_, C, g, PATCH, g, PATCH)
    patches = patches.transpose(0, 2, 4, 1, 3, 5).reshape(B_ * P, C * PATCH * PATCH)

    kern = functools.partial(limoe_embeddings_kernel,
                             seq=S_, n_patches=P,
                             img_type_idx=IMAGE_TOKEN_TYPE_IDX, eps=LN_EPS)
    emb = pl.pallas_call(
        kern,
        out_shape=jax.ShapeDtypeStruct((B_, s_total, H_), jnp.float32),
        in_specs=[_vspec() for _ in range(8)],
        out_specs=_vspec(),
    )(ids2d, tt2d, patches,
      prep["word_emb"], prep["text_pos_emb"], prep["img_pos_rest"],
      prep["patch_w2d"], prep["small"])

    # ----- mask path: pure input plumbing, fused by XLA outside the kernel -----
    pm = pixel_mask[:, ::PATCH, ::PATCH].reshape(B_, P).astype(jnp.float32)
    imask = jnp.concatenate([jnp.ones((B_, 1), jnp.float32), pm], axis=1)
    masks = jnp.concatenate([attention_mask.astype(jnp.float32), imask], axis=1)
    return emb, masks


# ---------------- one-time parameter preparation (outside the jit path) -------
def prepare_params(params):
    H_ = params["word_emb"].shape[1]
    small = jnp.concatenate([
        params["ln_w"],                       # 0
        params["ln_b"],                       # 1
        params["patch_b"],                    # 2
        params["cls_token"].reshape(1, H_),   # 3
        params["img_pos_emb"][0, 0:1],        # 4
        params["mod_emb"],                    # 5,6
        params["type_emb"],                   # 7,8
    ], axis=0)                                # (9, H)
    return {
        "word_emb": params["word_emb"],                                   # (V, H)
        "text_pos_emb": params["text_pos_emb"],                           # (MAX_POS, H)
        "img_pos_rest": params["img_pos_emb"][0, 1:],                     # (P, H)
        "patch_w2d": params["patch_w"].reshape(H_, PATCH_DIM).T,          # (Cp, H)
        "small": small,                                                   # (9, H)
    }


# ---------------- pure-JAX reference (same simplifications) ----------------
def limoe_embeddings_ref(input_ids, attention_mask, token_type_ids,
                         pixel_values, pixel_mask, params):
    B_, S_ = input_ids.shape
    C, I = pixel_values.shape[1], pixel_values.shape[2]
    g = I // PATCH
    P = g * g
    H_ = params["word_emb"].shape[1]
    # text
    emb = (params["word_emb"][input_ids]
           + params["type_emb"][token_type_ids]
           + params["text_pos_emb"][:S_][None])
    mean = emb.mean(-1, keepdims=True)
    var = ((emb - mean) ** 2).mean(-1, keepdims=True)
    emb = (emb - mean) / jnp.sqrt(var + LN_EPS) * params["ln_w"][0] + params["ln_b"][0]
    text = emb + params["mod_emb"][0]
    # image
    patches = pixel_values.reshape(B_, C, g, PATCH, g, PATCH)
    patches = patches.transpose(0, 2, 4, 1, 3, 5).reshape(B_, P, C * PATCH * PATCH)
    x = patches @ params["patch_w"].reshape(H_, -1).T + params["patch_b"][0]
    x = x + params["img_pos_emb"][0, 1:][None]
    cls = (params["cls_token"][0, 0] + params["img_pos_emb"][0, 0])[None, None, :]
    img = jnp.concatenate([jnp.broadcast_to(cls, (B_, 1, H_)), x], axis=1)
    img = img + params["mod_emb"][IMAGE_TOKEN_TYPE_IDX]
    embeddings = jnp.concatenate([text, img], axis=1)
    pm = pixel_mask[:, ::PATCH, ::PATCH].reshape(B_, P).astype(jnp.float32)
    img_mask = jnp.concatenate([jnp.ones((B_, 1), jnp.float32), pm], axis=1)
    masks = jnp.concatenate([attention_mask.astype(jnp.float32), img_mask], axis=1)
    return embeddings, masks


# ---------------- deterministic parameter init ----------------
def make_params(key):
    ks = iter(jax.random.split(key, 16))
    n = lambda shape: 0.02 * jax.random.normal(next(ks), shape, jnp.float32)
    return {
        "word_emb": n((VOCAB, HIDDEN)),
        "type_emb": n((TYPE_VOCAB, HIDDEN)),
        "text_pos_emb": n((MAX_POS, HIDDEN)),
        "ln_w": jnp.ones((1, HIDDEN), jnp.float32),
        "ln_b": jnp.zeros((1, HIDDEN), jnp.float32),
        "patch_w": n((HIDDEN, CHANNELS, PATCH, PATCH)),    # Conv2d weight (O,C,kh,kw)
        "patch_b": n((1, HIDDEN)),
        "cls_token": n((1, 1, HIDDEN)),
        "img_pos_emb": n((1, NUM_PATCHES + 1, HIDDEN)),
        "mod_emb": n((MODALITY_VOCAB, HIDDEN)),
    }


if __name__ == "__main__":
    key = jax.random.PRNGKey(0)
    kp, kids, kpx = jax.random.split(key, 3)
    params = make_params(kp)
    prep = prepare_params(params)          # one-time: no per-call param reshapes

    input_ids = jax.random.randint(kids, (B, SEQ), 0, VOCAB, dtype=jnp.int32)
    token_type_ids = jnp.zeros((B, SEQ), jnp.int32)
    attention_mask = jnp.ones((B, SEQ), jnp.float32)
    pixel_values = jax.random.normal(kpx, (B, CHANNELS, IMG, IMG), jnp.float32)
    pixel_mask = jnp.ones((B, IMG, IMG), jnp.float32)   # fully-valid mask path

    fwd = jax.jit(limoe_embeddings)
    emb, masks = fwd(input_ids, attention_mask, token_type_ids,
                     pixel_values, pixel_mask, prep)
    jax.block_until_ready((emb, masks))

    emb_ref, masks_ref = limoe_embeddings_ref(
        input_ids, attention_mask, token_type_ids, pixel_values, pixel_mask, params)

    assert emb.shape == (B, S_TOTAL, HIDDEN) and emb.dtype == jnp.float32
    assert masks.shape == (B, S_TOTAL)
    assert bool(jnp.allclose(emb, emb_ref, atol=1e-3, rtol=1e-3))
    assert bool(jnp.allclose(masks, masks_ref))
    print("KERNEL_OK")
</pallas_src>

<mosaic_0001>
module attributes {stable_mosaic.version = 11 : i64} {
  func.func @limoe_embeddings_kernel(%arg0: memref<16x1xi32, #tpu.memory_space<vmem>>, %arg1: memref<16x1xi32, #tpu.memory_space<vmem>>, %arg2: memref<32x64xf32, #tpu.memory_space<vmem>>, %arg3: memref<64x128xf32, #tpu.memory_space<vmem>>, %arg4: memref<16x128xf32, #tpu.memory_space<vmem>>, %arg5: memref<16x128xf32, #tpu.memory_space<vmem>>, %arg6: memref<64x128xf32, #tpu.memory_space<vmem>>, %arg7: memref<9x128xf32, #tpu.memory_space<vmem>>, %arg8: memref<2x25x128xf32, #tpu.memory_space<vmem>>) attributes {dimension_semantics = [], scalar_prefetch = 0 : i64, scratch_operands = 0 : i64, tpu.core_type = #tpu.core_type<tc>} {
    %c0 = arith.constant 0 : index
    %c0_0 = arith.constant 0 : index
    %0 = vector.load %arg7[%c0, %c0_0] : memref<9x128xf32, #tpu.memory_space<vmem>>, vector<1x128xf32>
    %c1 = arith.constant 1 : index
    %c0_1 = arith.constant 0 : index
    %1 = vector.load %arg7[%c1, %c0_1] : memref<9x128xf32, #tpu.memory_space<vmem>>, vector<1x128xf32>
    %c2 = arith.constant 2 : index
    %c0_2 = arith.constant 0 : index
    %2 = vector.load %arg7[%c2, %c0_2] : memref<9x128xf32, #tpu.memory_space<vmem>>, vector<1x128xf32>
    %c3 = arith.constant 3 : index
    %c0_3 = arith.constant 0 : index
    %3 = vector.load %arg7[%c3, %c0_3] : memref<9x128xf32, #tpu.memory_space<vmem>>, vector<1x128xf32>
    %c4 = arith.constant 4 : index
    %c0_4 = arith.constant 0 : index
    %4 = vector.load %arg7[%c4, %c0_4] : memref<9x128xf32, #tpu.memory_space<vmem>>, vector<1x128xf32>
    %c5 = arith.constant 5 : index
    %c0_5 = arith.constant 0 : index
    %5 = vector.load %arg7[%c5, %c0_5] : memref<9x128xf32, #tpu.memory_space<vmem>>, vector<1x128xf32>
    %c6 = arith.constant 6 : index
    %c0_6 = arith.constant 0 : index
    %6 = vector.load %arg7[%c6, %c0_6] : memref<9x128xf32, #tpu.memory_space<vmem>>, vector<1x128xf32>
    %c7 = arith.constant 7 : index
    %c0_7 = arith.constant 0 : index
    %7 = vector.load %arg7[%c7, %c0_7] : memref<9x128xf32, #tpu.memory_space<vmem>>, vector<1x128xf32>
    %c8 = arith.constant 8 : index
    %c0_8 = arith.constant 0 : index
    %8 = vector.load %arg7[%c8, %c0_8] : memref<9x128xf32, #tpu.memory_space<vmem>>, vector<1x128xf32>
    %c0_9 = arith.constant 0 : index
    %c0_10 = arith.constant 0 : index
    %9 = vector.load %arg0[%c0_9, %c0_10] : memref<16x1xi32, #tpu.memory_space<vmem>>, vector<16x1xi32>
    %c0_11 = arith.constant 0 : index
    %c0_12 = arith.constant 0 : index
    %10 = vector.load %arg1[%c0_11, %c0_12] : memref<16x1xi32, #tpu.memory_space<vmem>>, vector<16x1xi32>
    %11 = tpu.iota {dimensions = array<i32: 1>} : vector<16x64xi32>
    %12 = vector.broadcast %9 : vector<16x1xi32> to vector<16x64xi32>
    %13 = arith.cmpi eq, %11, %12 : vector<16x64xi32>
    %14 = arith.extui %13 : vector<16x64xi1> to vector<16x64xi32>
    %15 = arith.sitofp %14 : vector<16x64xi32> to vector<16x64xf32>
    %c0_13 = arith.constant 0 : index
    %c0_14 = arith.constant 0 : index
    %16 = vector.load %arg3[%c0_13, %c0_14] : memref<64x128xf32, #tpu.memory_space<vmem>>, vector<64x128xf32>
    %cst = arith.constant dense<0.000000e+00> : vector<16x128xf32>
    %17 = tpu.matmul %15, %16, %cst {dimension_numbers = #tpu.dot_dimension_numbers<[1], [0], [0], [1], [0, 0, 1, 1], [], []>} : vector<16x64xf32>, vector<64x128xf32>, vector<16x128xf32> -> vector<16x128xf32>
    %c0_i32 = arith.constant 0 : i32
    %18 = vector.broadcast %c0_i32 : i32 to vector<16x1xi32>
    %19 = arith.cmpi eq, %10, %18 : vector<16x1xi32>
    %20 = vector.shape_cast %19 : vector<16x1xi1> to vector<16x1xi1>
    %21 = vector.broadcast %20 : vector<16x1xi1> to vector<16x128xi1>
    %22 = vector.shape_cast %7 : vector<1x128xf32> to vector<1x128xf32>
    %23 = vector.broadcast %22 : vector<1x128xf32> to vector<16x128xf32>
    %24 = vector.shape_cast %8 : vector<1x128xf32> to vector<1x128xf32>
    %25 = vector.broadcast %24 : vector<1x128xf32> to vector<16x128xf32>
    %26 = arith.select %21, %23, %25 : vector<16x128xi1>, vector<16x128xf32>
    %27 = arith.addf %17, %26 : vector<16x128xf32>
    %c0_15 = arith.constant 0 : index
    %c0_16 = arith.constant 0 : index
    %28 = vector.load %arg4[%c0_15, %c0_16] : memref<16x128xf32, #tpu.memory_space<vmem>>, vector<8x128xf32>
    %c0_17 = arith.constant 0 : index
    %c0_18 = arith.constant 0 : index
    %29 = vector.load %arg2[%c0_17, %c0_18] : memref<32x64xf32, #tpu.memory_space<vmem>>, vector<32x64xf32>
    %c0_19 = arith.constant 0 : index
    %c0_20 = arith.constant 0 : index
    %30 = vector.load %arg6[%c0_19, %c0_20] : memref<64x128xf32, #tpu.memory_space<vmem>>, vector<64x128xf32>
    %cst_21 = arith.constant dense<0.000000e+00> : vector<32x128xf32>
    %31 = tpu.matmul %29, %30, %cst_21 {dimension_numbers = #tpu.dot_dimension_numbers<[1], [0], [0], [1], [0, 0, 1, 1], [], []>} : vector<32x64xf32>, vector<64x128xf32>, vector<32x128xf32> -> vector<32x128xf32>
    %32 = vector.broadcast %2 : vector<1x128xf32> to vector<32x128xf32>
    %33 = arith.addf %31, %32 : vector<32x128xf32>
    %34 = arith.addf %3, %4 : vector<1x128xf32>
    %35 = arith.addf %34, %6 : vector<1x128xf32>
    %c0_22 = arith.constant 0 : index
    %c0_23 = arith.constant 0 : index
    %36 = vector.load %arg5[%c0_22, %c0_23] : memref<16x128xf32, #tpu.memory_space<vmem>>, vector<16x128xf32>
    %37 = vector.extract_strided_slice %27 {offsets = [0, 0], sizes = [8, 128], strides = [1, 1]} : vector<16x128xf32> to vector<8x128xf32>
    %38 = arith.addf %37, %28 : vector<8x128xf32>
    %cst_24 = arith.constant dense<0.000000e+00> : vector<8xf32>
    %39 = vector.multi_reduction <add>, %38, %cst_24 [1] : vector<8x128xf32> to vector<8xf32>
    %40 = vector.shape_cast %39 : vector<8xf32> to vector<8x1xf32>
    %cst_25 = arith.constant 1.280000e+02 : f32
    %41 = vector.broadcast %cst_25 : f32 to vector<8x1xf32>
    %42 = arith.divf %40, %41 : vector<8x1xf32>
    %43 = arith.mulf %38, %38 : vector<8x128xf32>
    %cst_26 = arith.constant dense<0.000000e+00> : vector<8xf32>
    %44 = vector.multi_reduction <add>, %43, %cst_26 [1] : vector<8x128xf32> to vector<8xf32>
    %45 = vector.shape_cast %44 : vector<8xf32> to vector<8x1xf32>
    %cst_27 = arith.constant 1.280000e+02 : f32
    %46 = vector.broadcast %cst_27 : f32 to vector<8x1xf32>
    %47 = arith.divf %45, %46 : vector<8x1xf32>
    %48 = arith.mulf %42, %42 : vector<8x1xf32>
    %49 = arith.subf %47, %48 : vector<8x1xf32>
    %50 = vector.broadcast %42 : vector<8x1xf32> to vector<8x128xf32>
    %51 = arith.subf %38, %50 : vector<8x128xf32>
    %cst_28 = arith.constant 9.99999996E-13 : f32
    %52 = vector.broadcast %cst_28 : f32 to vector<8x1xf32>
    %53 = arith.addf %49, %52 : vector<8x1xf32>
    %54 = math.rsqrt %53 : vector<8x1xf32>
    %55 = vector.broadcast %54 : vector<8x1xf32> to vector<8x128xf32>
    %56 = arith.mulf %51, %55 : vector<8x128xf32>
    %57 = vector.broadcast %0 : vector<1x128xf32> to vector<8x128xf32>
    %58 = arith.mulf %56, %57 : vector<8x128xf32>
    %59 = vector.broadcast %1 : vector<1x128xf32> to vector<8x128xf32>
    %60 = arith.addf %58, %59 : vector<8x128xf32>
    %61 = vector.broadcast %5 : vector<1x128xf32> to vector<8x128xf32>
    %62 = arith.addf %60, %61 : vector<8x128xf32>
    %c0_29 = arith.constant 0 : index
    %c0_30 = arith.constant 0 : index
    %c0_31 = arith.constant 0 : index
    %63 = vector.load %arg8[%c0_29, %c0_30, %c0_31] : memref<2x25x128xf32, #tpu.memory_space<vmem>>, vector<1x8x128xf32>
    %64 = vector.shape_cast %63 : vector<1x8x128xf32> to vector<8x128xf32>
    %65 = vector.shape_cast %62 : vector<8x128xf32> to vector<1x8x128xf32>
    tpu.vector_store %arg8[%c0_29, %c0_30, %c0_31], %65 {strides = array<i32>} : memref<2x25x128xf32, #tpu.memory_space<vmem>>, vector<1x8x128xf32>,
    %c0_32 = arith.constant 0 : index
    %c8_33 = arith.constant 8 : index
    %c0_34 = arith.constant 0 : index
    %66 = vector.load %arg8[%c0_32, %c8_33, %c0_34] : memref<2x25x128xf32, #tpu.memory_space<vmem>>, vector<1x1x128xf32>
    %67 = vector.shape_cast %66 : vector<1x1x128xf32> to vector<1x128xf32>
    %68 = vector.shape_cast %35 : vector<1x128xf32> to vector<1x1x128xf32>
    tpu.vector_store %arg8[%c0_32, %c8_33, %c0_34], %68 {strides = array<i32>} : memref<2x25x128xf32, #tpu.memory_space<vmem>>, vector<1x1x128xf32>,
    %69 = vector.extract_strided_slice %33 {offsets = [0, 0], sizes = [16, 128], strides = [1, 1]} : vector<32x128xf32> to vector<16x128xf32>
    %70 = arith.addf %69, %36 : vector<16x128xf32>
    %71 = vector.broadcast %6 : vector<1x128xf32> to vector<16x128xf32>
    %72 = arith.addf %70, %71 : vector<16x128xf32>
    %c0_35 = arith.constant 0 : index
    %c9 = arith.constant 9 : index
    %c0_36 = arith.constant 0 : index
    %73 = vector.load %arg8[%c0_35, %c9, %c0_36] : memref<2x25x128xf32, #tpu.memory_space<vmem>>, vector<1x16x128xf32>
    %74 = vector.shape_cast %73 : vector<1x16x128xf32> to vector<16x128xf32>
    %75 = vector.shape_cast %72 : vector<16x128xf32> to vector<1x16x128xf32>
    tpu.vector_store %arg8[%c0_35, %c9, %c0_36], %75 {strides = array<i32>} : memref<2x25x128xf32, #tpu.memory_space<vmem>>, vector<1x16x128xf32>,
    %76 = vector.extract_strided_slice %27 {offsets = [8, 0], sizes = [8, 128], strides = [1, 1]} : vector<16x128xf32> to vector<8x128xf32>
    %77 = arith.addf %76, %28 : vector<8x128xf32>
    %cst_37 = arith.constant dense<0.000000e+00> : vector<8xf32>
    %78 = vector.multi_reduction <add>, %77, %cst_37 [1] : vector<8x128xf32> to vector<8xf32>
    %79 = vector.shape_cast %78 : vector<8xf32> to vector<8x1xf32>
    %cst_38 = arith.constant 1.280000e+02 : f32
    %80 = vector.broadcast %cst_38 : f32 to vector<8x1xf32>
    %81 = arith.divf %79, %80 : vector<8x1xf32>
    %82 = arith.mulf %77, %77 : vector<8x128xf32>
    %cst_39 = arith.constant dense<0.000000e+00> : vector<8xf32>
    %83 = vector.multi_reduction <add>, %82, %cst_39 [1] : vector<8x128xf32> to vector<8xf32>
    %84 = vector.shape_cast %83 : vector<8xf32> to vector<8x1xf32>
    %cst_40 = arith.constant 1.280000e+02 : f32
    %85 = vector.broadcast %cst_40 : f32 to vector<8x1xf32>
    %86 = arith.divf %84, %85 : vector<8x1xf32>
    %87 = arith.mulf %81, %81 : vector<8x1xf32>
    %88 = arith.subf %86, %87 : vector<8x1xf32>
    %89 = vector.broadcast %81 : vector<8x1xf32> to vector<8x128xf32>
    %90 = arith.subf %77, %89 : vector<8x128xf32>
    %cst_41 = arith.constant 9.99999996E-13 : f32
    %91 = vector.broadcast %cst_41 : f32 to vector<8x1xf32>
    %92 = arith.addf %88, %91 : vector<8x1xf32>
    %93 = math.rsqrt %92 : vector<8x1xf32>
    %94 = vector.broadcast %93 : vector<8x1xf32> to vector<8x128xf32>
    %95 = arith.mulf %90, %94 : vector<8x128xf32>
    %96 = vector.broadcast %0 : vector<1x128xf32> to vector<8x128xf32>
    %97 = arith.mulf %95, %96 : vector<8x128xf32>
    %98 = vector.broadcast %1 : vector<1x128xf32> to vector<8x128xf32>
    %99 = arith.addf %97, %98 : vector<8x128xf32>
    %100 = vector.broadcast %5 : vector<1x128xf32> to vector<8x128xf32>
    %101 = arith.addf %99, %100 : vector<8x128xf32>
    %c1_42 = arith.constant 1 : index
    %c0_43 = arith.constant 0 : index
    %c0_44 = arith.constant 0 : index
    %102 = vector.load %arg8[%c1_42, %c0_43, %c0_44] : memref<2x25x128xf32, #tpu.memory_space<vmem>>, vector<1x8x128xf32>
    %103 = vector.shape_cast %102 : vector<1x8x128xf32> to vector<8x128xf32>
    %104 = vector.shape_cast %101 : vector<8x128xf32> to vector<1x8x128xf32>
    tpu.vector_store %arg8[%c1_42, %c0_43, %c0_44], %104 {strides = array<i32>} : memref<2x25x128xf32, #tpu.memory_space<vmem>>, vector<1x8x128xf32>,
    %c1_45 = arith.constant 1 : index
    %c8_46 = arith.constant 8 : index
    %c0_47 = arith.constant 0 : index
    %105 = vector.load %arg8[%c1_45, %c8_46, %c0_47] : memref<2x25x128xf32, #tpu.memory_space<vmem>>, vector<1x1x128xf32>
    %106 = vector.shape_cast %105 : vector<1x1x128xf32> to vector<1x128xf32>
    %107 = vector.shape_cast %35 : vector<1x128xf32> to vector<1x1x128xf32>
    tpu.vector_store %arg8[%c1_45, %c8_46, %c0_47], %107 {strides = array<i32>} : memref<2x25x128xf32, #tpu.memory_space<vmem>>, vector<1x1x128xf32>,
    %108 = vector.extract_strided_slice %33 {offsets = [16, 0], sizes = [16, 128], strides = [1, 1]} : vector<32x128xf32> to vector<16x128xf32>
    %109 = arith.addf %108, %36 : vector<16x128xf32>
    %110 = vector.broadcast %6 : vector<1x128xf32> to vector<16x128xf32>
    %111 = arith.addf %109, %110 : vector<16x128xf32>
    %c1_48 = arith.constant 1 : index
    %c9_49 = arith.constant 9 : index
    %c0_50 = arith.constant 0 : index
    %112 = vector.load %arg8[%c1_48, %c9_49, %c0_50] : memref<2x25x128xf32, #tpu.memory_space<vmem>>, vector<1x16x128xf32>
    %113 = vector.shape_cast %112 : vector<1x16x128xf32> to vector<16x128xf32>
    %114 = vector.shape_cast %111 : vector<16x128xf32> to vector<1x16x128xf32>
    tpu.vector_store %arg8[%c1_48, %c9_49, %c0_50], %114 {strides = array<i32>} : memref<2x25x128xf32, #tpu.memory_space<vmem>>, vector<1x16x128xf32>,
    return
  }
}

</mosaic_0001>

<llo_original>
// kernel: limoe_embeddings.1
$region0: #{limoe_embeddings.1}
  #allocation0 [shape = 'u32[]', space=smem, size = 0x4, offset = 0x4, fixed_abs, tag = 'smem constant byte address 0x4 - core index']
  #allocation1 [shape = 'u32[144,128]{1,0:T(1,128)}', space=vmem, size = 0x12000, scoped, tag = 'internal scratch']
  %s0 = inlined_call_operand.vmem [shape: s32[16,1], index: 0, kind: input, shape index: {}]
  %s1 = inlined_call_operand.vmem [shape: s32[16,1], index: 1, kind: input, shape index: {}]
  %s2 = inlined_call_operand.vmem [shape: f32[32,64], index: 2, kind: input, shape index: {}]
  %s3 = inlined_call_operand.vmem [shape: f32[64,128], index: 3, kind: input, shape index: {}]
  %s4 = inlined_call_operand.vmem [shape: f32[16,128], index: 4, kind: input, shape index: {}]
  %s5 = inlined_call_operand.vmem [shape: f32[16,128], index: 5, kind: input, shape index: {}]
  %s6 = inlined_call_operand.vmem [shape: f32[64,128], index: 6, kind: input, shape index: {}]
  %s7 = inlined_call_operand.vmem [shape: f32[9,128], index: 7, kind: input, shape index: {}]
  %s8 = inlined_call_operand.vmem [shape: f32[2,25,128], index: 8, kind: output, shape index: {}]
  %s9 = sld [smem:[#allocation0]]
  $region42: #{limoe_embeddings.1} parent=0
    _
  %s11 = ssub.s32 1, %s9
  %s12 = scalar_select 0, %s11, %s9
  // Predicated region
  $region2: #{limoe_embeddings.1} parent=0 // pred_check
    _
  $region3: #{limoe_embeddings.1} parent=0 // pred_check_branch
    %14 = sbr.rel (0) target = $region5
  $region4: #{limoe_embeddings.1} parent=0 // pred_region
    _
  $region5: #{limoe_embeddings.1} parent=0 // pred_fallthru
    _
  // Predicated region
  $region6: #{limoe_embeddings.1} parent=0 // pred_check
    _
  $region7: #{limoe_embeddings.1} parent=0 // pred_check_branch
    %16 = sbr.rel (0) target = $region9
  $region8: #{limoe_embeddings.1} parent=0 // pred_region
    _
  $region9: #{limoe_embeddings.1} parent=0 // pred_fallthru
    _
  // Predicated region
  $region10: #{limoe_embeddings.1} parent=0 // pred_check
    _
  $region11: #{limoe_embeddings.1} parent=0 // pred_check_branch
    %18 = sbr.rel (0) target = $region13
  $region12: #{limoe_embeddings.1} parent=0 // pred_region
    _
  $region13: #{limoe_embeddings.1} parent=0 // pred_fallthru
    _
  // Predicated region
  $region14: #{limoe_embeddings.1} parent=0 // pred_check
    _
  $region15: #{limoe_embeddings.1} parent=0 // pred_check_branch
    %20 = sbr.rel (0) target = $region17
  $region16: #{limoe_embeddings.1} parent=0 // pred_region
    _
  $region17: #{limoe_embeddings.1} parent=0 // pred_fallthru
    _
  // Predicated region
  $region18: #{limoe_embeddings.1} parent=0 // pred_check
    _
  $region19: #{limoe_embeddings.1} parent=0 // pred_check_branch
    %22 = sbr.rel (0) target = $region21
  $region20: #{limoe_embeddings.1} parent=0 // pred_region
    _
  $region21: #{limoe_embeddings.1} parent=0 // pred_fallthru
    _
  // Predicated region
  $region22: #{limoe_embeddings.1} parent=0 // pred_check
    _
  $region23: #{limoe_embeddings.1} parent=0 // pred_check_branch
    %24 = sbr.rel (0) target = $region25
  $region24: #{limoe_embeddings.1} parent=0 // pred_region
    _
  $region25: #{limoe_embeddings.1} parent=0 // pred_fallthru
    _
  // Predicated region
  $region26: #{limoe_embeddings.1} parent=0 // pred_check
    _
  $region27: #{limoe_embeddings.1} parent=0 // pred_check_branch
    %26 = sbr.rel (0) target = $region29
  $region28: #{limoe_embeddings.1} parent=0 // pred_region
    _
  $region29: #{limoe_embeddings.1} parent=0 // pred_fallthru
    _
  // Predicated region
  $region30: #{limoe_embeddings.1} parent=0 // pred_check
    _
  $region31: #{limoe_embeddings.1} parent=0 // pred_check_branch
    %28 = sbr.rel (0) target = $region33
  $region32: #{limoe_embeddings.1} parent=0 // pred_region
    _
  $region33: #{limoe_embeddings.1} parent=0 // pred_fallthru
    _
  %v29 = vld [vmem:[%s7] sm:$0x1]
  %v30 = vld [vmem:[%s7 + $0x1] sm:$0x1]
  %v31 = vld [vmem:[%s7 + $0x2] sm:$0x1]
  %v32 = vld [vmem:[%s7 + $0x3] sm:$0x1]
  %v33 = vld [vmem:[%s7 + $0x4] sm:$0x1]
  %v34 = vld [vmem:[%s7 + $0x5] sm:$0x1]
  %v35 = vld [vmem:[%s7 + $0x6] sm:$0x1]
  %v36 = vld [vmem:[%s7 + $0x7] sm:$0x1]
  %v37 = vld [vmem:[%s7 + $0x8] sm:$0x1]
  %v38 = vld [vmem:[%s0] sm:$0xff]
  %v39 = vld [vmem:[%s0 + $0x8] sm:$0xff]
  %v40 = vld [vmem:[%s1] sm:$0xff]
  %v41 = vld [vmem:[%s1 + $0x8] sm:$0xff]
  %v42 = vlaneseq
  %v43 = vand.u32 %v42, 127
  %44 = vset.pattern.permute.xlu0 0
  %45 = vperm.xlu0 %44, %v38
  %v46 = vpop.permute.xlu0 %45
  %47 = vset.pattern.permute.xlu0 0
  %48 = vperm.xlu0 %47, %v39
  %v49 = vpop.permute.xlu0 %48
  %vm50 = vcmp.eq.s32.totalorder %v43, %v46
  %vm51 = vcmp.eq.s32.totalorder %v43, %v49
  %v52 = vsel %vm50, 1, 0
  %v53 = vsel %vm51, 1, 0
  %v54 = vcvt.s32.f32 %v52
  %v55 = vcvt.s32.f32 %v53
  %v56 = vld [vmem:[%s3] sm:$0xff]
  %v57 = vld [vmem:[%s3 + $0x8] sm:$0xff]
  %v58 = vld [vmem:[%s3 + $0x10] sm:$0xff]
  %v59 = vld [vmem:[%s3 + $0x18] sm:$0xff]
  %v60 = vld [vmem:[%s3 + $0x20] sm:$0xff]
  %v61 = vld [vmem:[%s3 + $0x28] sm:$0xff]
  %v62 = vld [vmem:[%s3 + $0x30] sm:$0xff]
  %v63 = vld [vmem:[%s3 + $0x38] sm:$0xff]
  %vm64 = vcmp.eq.s32.totalorder %v40, 0
  %vm65 = vcmp.eq.s32.totalorder %v41, 0
  %v66 = vsel %vm64, 1, 0
  %v67 = vsel %vm65, 1, 0
  %68 = vset.pattern.permute.xlu0 0
  %69 = vperm.xlu0 %68, %v66
  %v70 = vpop.permute.xlu0 %69
  %71 = vset.pattern.permute.xlu0 0
  %72 = vperm.xlu0 %71, %v67
  %v73 = vpop.permute.xlu0 %72
  %vm74 = vcmp.eq.s32.totalorder %v70, 1
  %vm75 = vcmp.eq.s32.totalorder %v73, 1
  %v76 = vlaneseq
  %v77 = vshrl.u32 %v76, 7
  %v78 = vsub.s32 0, %v77
  %v79 = vrot.slane %v36, %v78
  %v80 = vlaneseq
  %v81 = vshrl.u32 %v80, 7
  %v82 = vsub.s32 0, %v81
  %v83 = vrot.slane %v37, %v82
  %v84 = vsel %vm74, %v79, %v83
  %v85 = vsel %vm75, %v79, %v83
  %vm86 = vcmask 523264
  %v88 = vsel %vm86, %v54, 0
  %v91 = vsel %vm86, %v55, 0
  %93 = vmatprep.subr.mxu0 0.0
  %94 = vmatpush1.msra.mxu0 %v56
  %95 = vmatprep.subr.mxu0 0.0
  %96 = vmatpush1.msra.mxu0 %v57
  %97 = vmatprep.subr.mxu0 0.0
  %98 = vmatpush1.msra.mxu0 %v58
  %99 = vmatprep.subr.mxu0 0.0
  %100 = vmatpush1.msra.mxu0 %v59
  %101 = vmatprep.subr.mxu0 0.0
  %102 = vmatpush1.msra.mxu0 %v60
  %103 = vmatprep.subr.mxu0 0.0
  %104 = vmatpush1.msra.mxu0 %v61
  %105 = vmatprep.subr.mxu0 0.0
  %106 = vmatpush1.msra.mxu0 %v62
  %107 = vmatprep.subr.mxu0 0.0
  %108 = vmatpush1.msra.mxu0 %v63
  %109 = vmatprep.subr.mxu0 0.0
  %110 = vmatpush1.msra.mxu0 0.0
  %111 = vmatprep.subr.mxu0 0.0
  %112 = vmatpush1.msra.mxu0 0.0
  %113 = vmatprep.subr.mxu0 0.0
  %114 = vmatpush1.msra.mxu0 0.0
  %115 = vmatprep.subr.mxu0 0.0
  %116 = vmatpush1.msra.mxu0 0.0
  %117 = vmatprep.subr.mxu0 0.0
  %118 = vmatpush1.msra.mxu0 0.0
  %119 = vmatprep.subr.mxu0 0.0
  %120 = vmatpush1.msra.mxu0 0.0
  %121 = vmatprep.subr.mxu0 0.0
  %122 = vmatpush1.msra.mxu0 0.0
  %123 = vmatprep.subr.mxu0 0.0
  %124 = vmatpush1.msra.mxu0 0.0
  %125 = vmatprep.subr.mxu0 0.0
  %126 = vmatpush1.msra.mxu0 0.0
  %127 = vmatprep.subr.mxu0 0.0
  %128 = vmatpush1.msra.mxu0 0.0
  %129 = vmatprep.subr.mxu0 0.0
  %130 = vmatpush1.msra.mxu0 0.0
  %131 = vmatprep.subr.mxu0 0.0
  %132 = vmatpush1.msra.mxu0 0.0
  %133 = vmatprep.subr.mxu0 0.0
  %134 = vmatpush1.msra.mxu0 0.0
  %135 = vmatprep.subr.mxu0 0.0
  %136 = vmatpush1.msra.mxu0 0.0
  %137 = vmatprep.subr.mxu0 0.0
  %138 = vmatpush1.msra.mxu0 0.0
  %139 = vmatprep.subr.mxu0 0.0
  %140 = vmatpush1.msra.mxu0 0.0
  %141 = vmatprep.subr.mxu0 0.0
  %142 = vmatpush1.msra.mxu0 0.0
  %143 = vmatprep.subr.mxu0 0.0
  %144 = vmatpush1.msra.mxu0 0.0
  %145 = vmatprep.subr.mxu0 0.0
  %146 = vmatpush1.msra.mxu0 0.0
  %147 = vmatprep.subr.mxu0 0.0
  %148 = vmatpush1.msra.mxu0 0.0
  %149 = vmatprep.subr.mxu0 0.0
  %150 = vmatpush1.msra.mxu0 0.0
  %151 = vmatprep.subr.mxu0 0.0
  %152 = vmatpush1.msra.mxu0 0.0
  %153 = vmatprep.subr.mxu0 0.0
  %154 = vmatpush1.msra.mxu0 0.0
  %155 = vmatprep.subr.mxu0 0.0
  %156 = vmatpush1.msra.mxu0 0.0
  %157 = vmatprep.mubr.f32.mxu0 0.0
  %158 = vmatmul.mubr.f32.gmra.mrb[0].mxu0 %v88
  %v159 = vpop.f32.mrb[0].mxu0
  %v160 = vadd.f32 %v84, %v159
  %v161 = vpop.f32.mrb[0].mxu0
  %162 = vmatprep.mubr.f32.mxu0 0.0
  %163 = vmatmul.mubr.f32.gmra.mrb[0].mxu0 %v91
  %v164 = vpop.f32.mrb[0].mxu0
  %v165 = vadd.f32 %v85, %v164
  %v166 = vpop.f32.mrb[0].mxu0
  %167 = vdwg.mxu0
  %v168 = vld [vmem:[%s4] sm:$0xff]
  %v169 = vld [vmem:[%s2] sm:$0xff]
  %v170 = vld [vmem:[%s2 + $0x8] sm:$0xff]
  %v171 = vld [vmem:[%s2 + $0x10] sm:$0xff]
  %v172 = vld [vmem:[%s2 + $0x18] sm:$0xff]
  %v173 = vld [vmem:[%s6] sm:$0xff]
  %v174 = vld [vmem:[%s6 + $0x8] sm:$0xff]
  %v175 = vld [vmem:[%s6 + $0x10] sm:$0xff]
  %v176 = vld [vmem:[%s6 + $0x18] sm:$0xff]
  %v177 = vld [vmem:[%s6 + $0x20] sm:$0xff]
  %v178 = vld [vmem:[%s6 + $0x28] sm:$0xff]
  %v179 = vld [vmem:[%s6 + $0x30] sm:$0xff]
  %v180 = vld [vmem:[%s6 + $0x38] sm:$0xff]
  %v181 = vlaneseq
  %v182 = vshrl.u32 %v181, 7
  %v183 = vsub.s32 0, %v182
  %v184 = vrot.slane %v31, %v183
  %v186 = vsel %vm86, %v169, 0
  %v189 = vsel %vm86, %v170, 0
  %v192 = vsel %vm86, %v171, 0
  %v195 = vsel %vm86, %v172, 0
  %197 = vmatprep.subr.mxu0 0.0
  %198 = vmatpush1.msra.mxu0 %v173
  %199 = vmatprep.subr.mxu0 0.0
  %200 = vmatpush1.msra.mxu0 %v174
  %201 = vmatprep.subr.mxu0 0.0
  %202 = vmatpush1.msra.mxu0 %v175
  %203 = vmatprep.subr.mxu0 0.0
  %204 = vmatpush1.msra.mxu0 %v176
  %205 = vmatprep.subr.mxu0 0.0
  %206 = vmatpush1.msra.mxu0 %v177
  %207 = vmatprep.subr.mxu0 0.0
  %208 = vmatpush1.msra.mxu0 %v178
  %209 = vmatprep.subr.mxu0 0.0
  %210 = vmatpush1.msra.mxu0 %v179
  %211 = vmatprep.subr.mxu0 0.0
  %212 = vmatpush1.msra.mxu0 %v180
  %213 = vmatprep.subr.mxu0 0.0
  %214 = vmatpush1.msra.mxu0 0.0
  %215 = vmatprep.subr.mxu0 0.0
  %216 = vmatpush1.msra.mxu0 0.0
  %217 = vmatprep.subr.mxu0 0.0
  %218 = vmatpush1.msra.mxu0 0.0
  %219 = vmatprep.subr.mxu0 0.0
  %220 = vmatpush1.msra.mxu0 0.0
  %221 = vmatprep.subr.mxu0 0.0
  %222 = vmatpush1.msra.mxu0 0.0
  %223 = vmatprep.subr.mxu0 0.0
  %224 = vmatpush1.msra.mxu0 0.0
  %225 = vmatprep.subr.mxu0 0.0
  %226 = vmatpush1.msra.mxu0 0.0
  %227 = vmatprep.subr.mxu0 0.0
  %228 = vmatpush1.msra.mxu0 0.0
  %229 = vmatprep.subr.mxu0 0.0
  %230 = vmatpush1.msra.mxu0 0.0
  %231 = vmatprep.subr.mxu0 0.0
  %232 = vmatpush1.msra.mxu0 0.0
  %233 = vmatprep.subr.mxu0 0.0
  %234 = vmatpush1.msra.mxu0 0.0
  %235 = vmatprep.subr.mxu0 0.0
  %236 = vmatpush1.msra.mxu0 0.0
  %237 = vmatprep.subr.mxu0 0.0
  %238 = vmatpush1.msra.mxu0 0.0
  %239 = vmatprep.subr.mxu0 0.0
  %240 = vmatpush1.msra.mxu0 0.0
  %241 = vmatprep.subr.mxu0 0.0
  %242 = vmatpush1.msra.mxu0 0.0
  %243 = vmatprep.subr.mxu0 0.0
  %244 = vmatpush1.msra.mxu0 0.0
  %245 = vmatprep.subr.mxu0 0.0
  %246 = vmatpush1.msra.mxu0 0.0
  %247 = vmatprep.subr.mxu0 0.0
  %248 = vmatpush1.msra.mxu0 0.0
  %249 = vmatprep.subr.mxu0 0.0
  %250 = vmatpush1.msra.mxu0 0.0
  %251 = vmatprep.subr.mxu0 0.0
  %252 = vmatpush1.msra.mxu0 0.0
  %253 = vmatprep.subr.mxu0 0.0
  %254 = vmatpush1.msra.mxu0 0.0
  %255 = vmatprep.subr.mxu0 0.0
  %256 = vmatpush1.msra.mxu0 0.0
  %257 = vmatprep.subr.mxu0 0.0
  %258 = vmatpush1.msra.mxu0 0.0
  %259 = vmatprep.subr.mxu0 0.0
  %260 = vmatpush1.msra.mxu0 0.0
  %261 = vmatprep.mubr.f32.mxu0 0.0
  %262 = vmatmul.mubr.f32.gmra.mrb[0].mxu0 %v186
  %v263 = vpop.f32.mrb[0].mxu0
  %v264 = vadd.f32 %v184, %v263
  %v265 = vpop.f32.mrb[0].mxu0
  %266 = vmatprep.mubr.f32.mxu0 0.0
  %267 = vmatmul.mubr.f32.gmra.mrb[0].mxu0 %v189
  %v268 = vpop.f32.mrb[0].mxu0
  %v269 = vadd.f32 %v184, %v268
  %v270 = vpop.f32.mrb[0].mxu0
  %271 = vmatprep.mubr.f32.mxu0 0.0
  %272 = vmatmul.mubr.f32.gmra.mrb[0].mxu0 %v192
  %v273 = vpop.f32.mrb[0].mxu0
  %v274 = vadd.f32 %v184, %v273
  %v275 = vpop.f32.mrb[0].mxu0
  %276 = vmatprep.mubr.f32.mxu0 0.0
  %277 = vmatmul.mubr.f32.gmra.mrb[0].mxu0 %v195
  %v278 = vpop.f32.mrb[0].mxu0
  %v279 = vadd.f32 %v184, %v278
  %v280 = vpop.f32.mrb[0].mxu0
  %281 = vdwg.mxu0
  %v282 = vadd.f32 %v32, %v33
  %v283 = vadd.f32 %v282, %v35
  %v284 = vld [vmem:[%s5] sm:$0xff]
  %v285 = vld [vmem:[%s5 + $0x8] sm:$0xff]
  %v286 = vadd.f32 %v160, %v168
  %287 = vadd.xlane.f32.xlu0 %v286
  %v288 = vpop.xlane.xlu0 %287
  %v289 = vrcp.pop 128.0
  %v290 = vmul.f32 %v288, %v289
  %v291 = vmul.f32 %v286, %v286
  %292 = vadd.xlane.f32.xlu0 %v291
  %v293 = vpop.xlane.xlu0 %292
  %v294 = vmul.f32 %v293, %v289
  %v295 = vmul.f32 %v290, %v290
  %v296 = vsub.f32 %v294, %v295
  %v297 = vsub.f32 %v286, %v290
  %v298 = vadd.f32 %v296, 1e-12
  %v299 = vrsqrt.pop %v298
  %v300 = vmul.f32 %v297, %v299
  %v301 = vlaneseq
  %v302 = vshrl.u32 %v301, 7
  %v303 = vsub.s32 0, %v302
  %v304 = vrot.slane %v29, %v303
  %v305 = vmul.f32 %v300, %v304
  %v306 = vlaneseq
  %v307 = vshrl.u32 %v306, 7
  %v308 = vsub.s32 0, %v307
  %v309 = vrot.slane %v30, %v308
  %v310 = vadd.f32 %v305, %v309
  %v311 = vlaneseq
  %v312 = vshrl.u32 %v311, 7
  %v313 = vsub.s32 0, %v312
  %v314 = vrot.slane %v34, %v313
  %v315 = vadd.f32 %v310, %v314
  %316 = vst [vmem:[%s8] sm:$0xff] %v315
  %317 = vst [vmem:[%s8 + $0x8] sm:$0x1] %v283
  %v318 = vadd.f32 %v264, %v284
  %v319 = vadd.f32 %v269, %v285
  %v320 = vlaneseq
  %v321 = vshrl.u32 %v320, 7
  %v322 = vsub.s32 0, %v321
  %v323 = vrot.slane %v35, %v322
  %v324 = vadd.f32 %v318, %v323
  %v325 = vadd.f32 %v319, %v323
  %326 = vst [vmem:[%s8 + $0x9] sm:$0xff] %v324
  %327 = vst [vmem:[%s8 + $0x11] sm:$0xff] %v325
  %v328 = vadd.f32 %v165, %v168
  %329 = vadd.xlane.f32.xlu0 %v328
  %v330 = vpop.xlane.xlu0 %329
  %v331 = vmul.f32 %v330, %v289
  %v332 = vmul.f32 %v328, %v328
  %333 = vadd.xlane.f32.xlu0 %v332
  %v334 = vpop.xlane.xlu0 %333
  %v335 = vmul.f32 %v334, %v289
  %v336 = vmul.f32 %v331, %v331
  %v337 = vsub.f32 %v335, %v336
  %v338 = vsub.f32 %v328, %v331
  %v339 = vadd.f32 %v337, 1e-12
  %v340 = vrsqrt.pop %v339
  %v341 = vmul.f32 %v338, %v340
  %v342 = vmul.f32 %v341, %v304
  %v343 = vadd.f32 %v342, %v309
  %v344 = vadd.f32 %v343, %v314
  %s345 = scalar_lea.vmem %s8, 32
  %346 = vst [vmem:[%s345] sm:$0xff] %v344
  %347 = vst [vmem:[%s345 + $0x8] sm:$0x1] %v283
  %v348 = vadd.f32 %v274, %v284
  %v349 = vadd.f32 %v279, %v285
  %v350 = vadd.f32 %v348, %v323
  %v351 = vadd.f32 %v349, %v323
  %352 = vst [vmem:[%s345 + $0x9] sm:$0xff] %v350
  %353 = vst [vmem:[%s345 + $0x11] sm:$0xff] %v351
  // Predicated region
  $region34: #{limoe_embeddings.1} parent=0 // pred_check
    _
  $region35: #{limoe_embeddings.1} parent=0 // pred_check_branch
    %355 = sbr.rel (0) target = $region37
  $region36: #{limoe_embeddings.1} parent=0 // pred_region
    _
  $region37: #{limoe_embeddings.1} parent=0 // pred_fallthru
    _
  // Predicated region
  $region38: #{limoe_embeddings.1} parent=0 // pred_check
    _
  $region39: #{limoe_embeddings.1} parent=0 // pred_check_branch
    %357 = sbr.rel (0) target = $region41
  $region40: #{limoe_embeddings.1} parent=0 // pred_region
    _
  $region41: #{limoe_embeddings.1} parent=0 // pred_fallthru
    _

</llo_original>
